<compile_context>
chip_gen: v7x
topology: tpu7x:2x2x1
jax: 0.10.0
libtpu: 0.0.40
codegen_flags: <defaults>
</compile_context>

<pallas_src>
import functools
import math

import jax
import jax.numpy as jnp
import numpy as np
from jax import lax
from jax.experimental import pallas as pl
from jax.experimental.pallas import tpu as pltpu

MEAN_MIN, MEAN_MAX = -9.0, 9.0
LOGSTD_MIN, LOGSTD_MAX = -5.0, 2.0
EPS = 1e-6
MDN_TEMPERATURE = 1.0
LOG2PI = math.log(2.0 * math.pi)

# Small problem sizes consistent with the module.
BATCH = 8
IN_SPLITS = (10, 6)            # forward does torch.cat(inputs, 1)
NUM_INPUTS = sum(IN_SPLITS)    # 16
HIDDEN = (32, 32)
NUM_COMPONENTS = 2
NUM_ACTIONS = 8                # == num_components * action_dim
ACTION_DIM = NUM_ACTIONS // NUM_COMPONENTS  # 4

# Packed output slab layout (lane offsets). Padded to 128 lanes so the final
# store is a single unmasked full-vreg-width store and one output DMA.
_A, _K, _KA = ACTION_DIM, NUM_COMPONENTS, NUM_COMPONENTS * ACTION_DIM
O_ACT = 0
O_PRE = O_ACT + _A
O_LOGP = O_PRE + _A
O_PLOGP = O_LOGP + 1
O_MEANS = O_PLOGP + _A
O_LOGSTD = O_MEANS + _KA
O_STD = O_LOGSTD + _KA
O_LOGITS = O_STD + _KA
SLAB_USED = O_LOGITS + _K          # 39
SLAB_WIDTH = 128                   # lane-dense output


def _policy_kernel(num_components, action_dim, slab_width,
                   x0_ref, x1_ref, w1a_ref, w1b_ref, b1_ref,
                   w2_ref, b2_ref, wh_ref, bh_ref,
                   nrm_ref, gum_ref,
                   out_ref):
    f32 = jnp.float32
    K, A = num_components, action_dim
    KA = K * A
    B = x0_ref.shape[0]

    # MLP trunk; the input concat is folded into two matmuls on the split w1.
    h1 = jnp.maximum(
        jnp.dot(x0_ref[...], w1a_ref[...], preferred_element_type=f32)
        + jnp.dot(x1_ref[...], w1b_ref[...], preferred_element_type=f32)
        + b1_ref[...], 0.0)
    h2 = jnp.maximum(
        jnp.dot(h1, w2_ref[...], preferred_element_type=f32) + b2_ref[...], 0.0)

    # Fused heads: one MXU pass for means | logstds | logits.
    heads = jnp.dot(h2, wh_ref[...], preferred_element_type=f32) + bh_ref[...]
    means = jnp.clip(heads[:, 0:KA], MEAN_MIN, MEAN_MAX)           # (B, K*A)
    logstds = jnp.clip(heads[:, KA:2 * KA], LOGSTD_MIN, LOGSTD_MAX)  # (B, K*A)
    logits = heads[:, 2 * KA:2 * KA + K] / MDN_TEMPERATURE         # (B, K)
    stds = jnp.exp(logstds)
    inv_stds = jnp.exp(-logstds)                                   # EUP, no divide

    # Reparameterized Normal samples for every mixture component.
    pretanh_all = means + stds * nrm_ref[...]                      # (B, K*A)

    # Categorical sample via Gumbel-max (first-max tie breaking, like argmax).
    scores = logits + gum_ref[...]                                 # (B, K)
    if K == 2:
        # Single VPU compare; no cross-lane reductions.
        sel0 = (scores[:, 0:1] >= scores[:, 1:2]).astype(f32)      # (B, 1)
        pre = (sel0 * pretanh_all[:, 0:A]
               + (1.0 - sel0) * pretanh_all[:, A:2 * A])           # (B, A)
    else:
        smax = jnp.max(scores, axis=-1, keepdims=True)
        idx = lax.broadcasted_iota(jnp.int32, scores.shape, 1)
        comp = jnp.min(jnp.where(scores == smax, idx, K),
                       axis=-1, keepdims=True)
        onehot = (idx == comp).astype(f32)
        pre = jnp.zeros((B, A), f32)
        for k in range(K):
            pre = pre + onehot[:, k:k + 1] * pretanh_all[:, k * A:(k + 1) * A]

    act = jnp.tanh(pre)                                            # (B, A)

    # component_log_prob = logits - logsumexp(logits)
    lmax = jnp.max(logits, axis=-1, keepdims=True)
    lse = lmax + jnp.log(jnp.sum(jnp.exp(logits - lmax), axis=-1, keepdims=True))
    comp_logp = logits - lse                                       # (B, K)

    # Per-dimension Normal log-prob of the chosen pretanh action, per component.
    mix = []
    for k in range(K):
        mu_k = means[:, k * A:(k + 1) * A]
        ls_k = logstds[:, k * A:(k + 1) * A]
        is_k = inv_stds[:, k * A:(k + 1) * A]
        z = (pre - mu_k) * is_k
        normal_lp = -0.5 * z * z - ls_k - 0.5 * LOG2PI             # (B, A)
        mix.append(comp_logp[:, k:k + 1] + normal_lp)

    # Stable logsumexp over the component axis (static python reduction).
    m = mix[0]
    for k in range(1, K):
        m = jnp.maximum(m, mix[k])
    s = jnp.zeros_like(m)
    for k in range(K):
        s = s + jnp.exp(mix[k] - m)
    pretanh_logp = m + jnp.log(s)                                  # (B, A)

    logp = jnp.sum(pretanh_logp - jnp.log(1.0 - act * act + EPS),
                   axis=1, keepdims=True)                          # (B, 1)

    # Single packed, lane-dense output slab -> one unmasked store, one DMA.
    pieces = [act, pre, logp, pretanh_logp, means, logstds, stds, logits]
    used = sum(p.shape[1] for p in pieces)
    pad = slab_width - used
    if pad > 0:
        pieces.append(jnp.zeros((B, pad), f32))
    out_ref[...] = jnp.concatenate(pieces, axis=1)


def prepare_params(p):
    """One-time host-side fusion of parameters (no per-call XLA ops)."""
    return {
        "w1a": p["w1"][:IN_SPLITS[0]],                             # (10, H0)
        "w1b": p["w1"][IN_SPLITS[0]:],                             # (6,  H0)
        "b1": p["b1"],
        "w2": p["w2"],
        "b2": p["b2"],
        "wh": jnp.concatenate([p["wm"], p["ws"], p["wl"]], axis=1),  # (H1, 2KA+K)
        "bh": jnp.concatenate([p["bm"], p["bs"], p["bl"]], axis=1),  # (1,  2KA+K)
    }


def tanh_mixture_normal_policy_forward(inputs, prepared, nrm, gum):
    """inputs: tuple of (B, d_i) arrays; nrm: (B, K*A) N(0,1); gum: (B, K) Gumbel."""
    x0, x1 = inputs
    B = x0.shape[0]
    K, A = NUM_COMPONENTS, ACTION_DIM

    args = (x0, x1, prepared["w1a"], prepared["w1b"], prepared["b1"],
            prepared["w2"], prepared["b2"], prepared["wh"], prepared["bh"],
            nrm, gum)

    vmem = functools.partial(pl.BlockSpec, memory_space=pltpu.MemorySpace.VMEM)
    slab = pl.pallas_call(
        functools.partial(_policy_kernel, K, A, SLAB_WIDTH),
        out_shape=jax.ShapeDtypeStruct((B, SLAB_WIDTH), jnp.float32),
        in_specs=[vmem() for _ in args],
        out_specs=vmem(),
    )(*args)

    action = slab[:, O_ACT:O_ACT + A]
    pre = slab[:, O_PRE:O_PRE + A]
    logp = slab[:, O_LOGP:O_LOGP + 1]
    plogp = slab[:, O_PLOGP:O_PLOGP + A]
    means = slab[:, O_MEANS:O_MEANS + K * A].reshape(B, K, A)
    stds = slab[:, O_STD:O_STD + K * A].reshape(B, K, A)
    logits = slab[:, O_LOGITS:O_LOGITS + K]

    dists = (logits, (means, stds))   # (component_dist, normal_dist) params
    network_state = ()
    return (action, pre, logp, plogp, dists), network_state


def _reference_forward(inputs, params, nrm, gum):
    x = jnp.concatenate(inputs, axis=1)
    B = x.shape[0]
    K, A = NUM_COMPONENTS, ACTION_DIM
    h1 = jax.nn.relu(x @ params["w1"] + params["b1"])
    h2 = jax.nn.relu(h1 @ params["w2"] + params["b2"])
    means = jnp.clip(h2 @ params["wm"] + params["bm"], MEAN_MIN, MEAN_MAX)
    logstds = jnp.clip(h2 @ params["ws"] + params["bs"], LOGSTD_MIN, LOGSTD_MAX)
    stds = jnp.exp(logstds)
    logits = (h2 @ params["wl"] + params["bl"]) / MDN_TEMPERATURE
    means3 = means.reshape(B, K, A)
    logstds3 = logstds.reshape(B, K, A)
    stds3 = stds.reshape(B, K, A)
    pretanh_all = means3 + stds3 * nrm.reshape(B, K, A)
    comp = jnp.argmax(logits + gum, axis=-1)
    pre = jnp.take_along_axis(pretanh_all, comp[:, None, None], axis=1)[:, 0, :]
    act = jnp.tanh(pre)
    comp_logp = jax.nn.log_softmax(logits, axis=-1)
    z = (pre[:, None, :] - means3) / stds3
    normal_lp = -0.5 * z * z - logstds3 - 0.5 * LOG2PI
    plogp = jax.scipy.special.logsumexp(comp_logp[:, :, None] + normal_lp, axis=1)
    logp = jnp.sum(plogp - jnp.log(1.0 - act ** 2 + EPS), axis=1, keepdims=True)
    return act, pre, logp, plogp, means, stds, logits


def _init_params(key):
    """Deterministic PyTorch-Linear-style init; weights stored as (in, out)."""
    def linear(k, fan_in, fan_out):
        kw, kb = jax.random.split(k)
        bound = 1.0 / math.sqrt(fan_in)
        w = jax.random.uniform(kw, (fan_in, fan_out), jnp.float32, -bound, bound)
        b = jax.random.uniform(kb, (1, fan_out), jnp.float32, -bound, bound)
        return w, b

    ks = jax.random.split(key, 5)
    p = {}
    p["w1"], p["b1"] = linear(ks[0], NUM_INPUTS, HIDDEN[0])
    p["w2"], p["b2"] = linear(ks[1], HIDDEN[0], HIDDEN[1])
    p["wm"], p["bm"] = linear(ks[2], HIDDEN[1], NUM_ACTIONS)
    p["ws"], p["bs"] = linear(ks[3], HIDDEN[1], NUM_ACTIONS)
    p["wl"], p["bl"] = linear(ks[4], HIDDEN[1], NUM_COMPONENTS)
    return p


if __name__ == "__main__":
    root = jax.random.PRNGKey(0)
    k_param, k_in0, k_in1, k_nrm, k_gum = jax.random.split(root, 5)

    params = _init_params(k_param)
    prepared = prepare_params(params)
    inputs = (
        jax.random.normal(k_in0, (BATCH, IN_SPLITS[0]), jnp.float32),
        jax.random.normal(k_in1, (BATCH, IN_SPLITS[1]), jnp.float32),
    )
    nrm = jax.random.normal(k_nrm, (BATCH, NUM_COMPONENTS * ACTION_DIM), jnp.float32)
    u = jax.random.uniform(k_gum, (BATCH, NUM_COMPONENTS), jnp.float32,
                           minval=1e-20, maxval=1.0)
    gum = -jnp.log(-jnp.log(u))

    (action, pre, logp, plogp, dists), _ = tanh_mixture_normal_policy_forward(
        inputs, prepared, nrm, gum)
    jax.block_until_ready((action, pre, logp, plogp, dists))

    # Plain-JAX reference check (loose tol: MXU vs XLA matmul rounding).
    ref = _reference_forward(inputs, params, nrm, gum)
    got = (action, pre, logp, plogp,
           dists[1][0].reshape(BATCH, -1),   # means
           dists[1][1].reshape(BATCH, -1),   # stds (emitted by kernel)
           dists[0])                         # component logits
    for g, r in zip(got, ref):
        np.testing.assert_allclose(np.asarray(g), np.asarray(r),
                                   rtol=5e-2, atol=5e-2)

    assert action.shape == (BATCH, ACTION_DIM)
    assert logp.shape == (BATCH, 1)
    print("KERNEL_OK")
</pallas_src>

<mosaic_0001>
module attributes {stable_mosaic.version = 11 : i64} {
  func.func @_policy_kernel(%arg0: memref<8x10xf32, #tpu.memory_space<vmem>>, %arg1: memref<8x6xf32, #tpu.memory_space<vmem>>, %arg2: memref<10x32xf32, #tpu.memory_space<vmem>>, %arg3: memref<6x32xf32, #tpu.memory_space<vmem>>, %arg4: memref<1x32xf32, #tpu.memory_space<vmem>>, %arg5: memref<32x32xf32, #tpu.memory_space<vmem>>, %arg6: memref<1x32xf32, #tpu.memory_space<vmem>>, %arg7: memref<32x18xf32, #tpu.memory_space<vmem>>, %arg8: memref<1x18xf32, #tpu.memory_space<vmem>>, %arg9: memref<8x8xf32, #tpu.memory_space<vmem>>, %arg10: memref<8x2xf32, #tpu.memory_space<vmem>>, %arg11: memref<8x128xf32, #tpu.memory_space<vmem>>) attributes {dimension_semantics = [], scalar_prefetch = 0 : i64, scratch_operands = 0 : i64, tpu.core_type = #tpu.core_type<tc>} {
    %c0 = arith.constant 0 : index
    %c0_0 = arith.constant 0 : index
    %0 = vector.load %arg0[%c0, %c0_0] : memref<8x10xf32, #tpu.memory_space<vmem>>, vector<8x10xf32>
    %c0_1 = arith.constant 0 : index
    %c0_2 = arith.constant 0 : index
    %1 = vector.load %arg2[%c0_1, %c0_2] : memref<10x32xf32, #tpu.memory_space<vmem>>, vector<10x32xf32>
    %cst = arith.constant dense<0.000000e+00> : vector<8x32xf32>
    %2 = tpu.matmul %0, %1, %cst {dimension_numbers = #tpu.dot_dimension_numbers<[1], [0], [0], [1], [0, 0, 1, 1], [], []>} : vector<8x10xf32>, vector<10x32xf32>, vector<8x32xf32> -> vector<8x32xf32>
    %c0_3 = arith.constant 0 : index
    %c0_4 = arith.constant 0 : index
    %3 = vector.load %arg1[%c0_3, %c0_4] : memref<8x6xf32, #tpu.memory_space<vmem>>, vector<8x6xf32>
    %c0_5 = arith.constant 0 : index
    %c0_6 = arith.constant 0 : index
    %4 = vector.load %arg3[%c0_5, %c0_6] : memref<6x32xf32, #tpu.memory_space<vmem>>, vector<6x32xf32>
    %cst_7 = arith.constant dense<0.000000e+00> : vector<8x32xf32>
    %5 = tpu.matmul %3, %4, %cst_7 {dimension_numbers = #tpu.dot_dimension_numbers<[1], [0], [0], [1], [0, 0, 1, 1], [], []>} : vector<8x6xf32>, vector<6x32xf32>, vector<8x32xf32> -> vector<8x32xf32>
    %6 = arith.addf %2, %5 : vector<8x32xf32>
    %c0_8 = arith.constant 0 : index
    %c0_9 = arith.constant 0 : index
    %7 = vector.load %arg4[%c0_8, %c0_9] : memref<1x32xf32, #tpu.memory_space<vmem>>, vector<1x32xf32>
    %8 = vector.broadcast %7 : vector<1x32xf32> to vector<8x32xf32>
    %9 = arith.addf %6, %8 : vector<8x32xf32>
    %cst_10 = arith.constant 0.000000e+00 : f32
    %10 = vector.broadcast %cst_10 : f32 to vector<8x32xf32>
    %11 = arith.maximumf %9, %10 : vector<8x32xf32>
    %c0_11 = arith.constant 0 : index
    %c0_12 = arith.constant 0 : index
    %12 = vector.load %arg5[%c0_11, %c0_12] : memref<32x32xf32, #tpu.memory_space<vmem>>, vector<32x32xf32>
    %cst_13 = arith.constant dense<0.000000e+00> : vector<8x32xf32>
    %13 = tpu.matmul %11, %12, %cst_13 {dimension_numbers = #tpu.dot_dimension_numbers<[1], [0], [0], [1], [0, 0, 1, 1], [], []>} : vector<8x32xf32>, vector<32x32xf32>, vector<8x32xf32> -> vector<8x32xf32>
    %c0_14 = arith.constant 0 : index
    %c0_15 = arith.constant 0 : index
    %14 = vector.load %arg6[%c0_14, %c0_15] : memref<1x32xf32, #tpu.memory_space<vmem>>, vector<1x32xf32>
    %15 = vector.broadcast %14 : vector<1x32xf32> to vector<8x32xf32>
    %16 = arith.addf %13, %15 : vector<8x32xf32>
    %cst_16 = arith.constant 0.000000e+00 : f32
    %17 = vector.broadcast %cst_16 : f32 to vector<8x32xf32>
    %18 = arith.maximumf %16, %17 : vector<8x32xf32>
    %c0_17 = arith.constant 0 : index
    %c0_18 = arith.constant 0 : index
    %19 = vector.load %arg7[%c0_17, %c0_18] : memref<32x18xf32, #tpu.memory_space<vmem>>, vector<32x18xf32>
    %cst_19 = arith.constant dense<0.000000e+00> : vector<8x18xf32>
    %20 = tpu.matmul %18, %19, %cst_19 {dimension_numbers = #tpu.dot_dimension_numbers<[1], [0], [0], [1], [0, 0, 1, 1], [], []>} : vector<8x32xf32>, vector<32x18xf32>, vector<8x18xf32> -> vector<8x18xf32>
    %c0_20 = arith.constant 0 : index
    %c0_21 = arith.constant 0 : index
    %21 = vector.load %arg8[%c0_20, %c0_21] : memref<1x18xf32, #tpu.memory_space<vmem>>, vector<1x18xf32>
    %22 = vector.broadcast %21 : vector<1x18xf32> to vector<8x18xf32>
    %23 = arith.addf %20, %22 : vector<8x18xf32>
    %24 = vector.extract_strided_slice %23 {offsets = [0, 0], sizes = [8, 8], strides = [1, 1]} : vector<8x18xf32> to vector<8x8xf32>
    %cst_22 = arith.constant -9.000000e+00 : f32
    %cst_23 = arith.constant 9.000000e+00 : f32
    %25 = vector.broadcast %cst_22 : f32 to vector<8x8xf32>
    %26 = arith.maximumf %25, %24 : vector<8x8xf32>
    %27 = vector.broadcast %cst_23 : f32 to vector<8x8xf32>
    %28 = arith.minimumf %27, %26 : vector<8x8xf32>
    %29 = vector.extract_strided_slice %23 {offsets = [0, 8], sizes = [8, 8], strides = [1, 1]} : vector<8x18xf32> to vector<8x8xf32>
    %cst_24 = arith.constant -5.000000e+00 : f32
    %cst_25 = arith.constant 2.000000e+00 : f32
    %30 = vector.broadcast %cst_24 : f32 to vector<8x8xf32>
    %31 = arith.maximumf %30, %29 : vector<8x8xf32>
    %32 = vector.broadcast %cst_25 : f32 to vector<8x8xf32>
    %33 = arith.minimumf %32, %31 : vector<8x8xf32>
    %34 = vector.extract_strided_slice %23 {offsets = [0, 16], sizes = [8, 2], strides = [1, 1]} : vector<8x18xf32> to vector<8x2xf32>
    %cst_26 = arith.constant 1.000000e+00 : f32
    %35 = vector.broadcast %cst_26 : f32 to vector<8x2xf32>
    %36 = arith.divf %34, %35 : vector<8x2xf32>
    %37 = math.exp %33 : vector<8x8xf32>
    %cst_27 = arith.constant 0.000000e+00 : f32
    %38 = vector.broadcast %cst_27 : f32 to vector<8x8xf32>
    %39 = arith.subf %38, %33 : vector<8x8xf32>
    %40 = math.exp %39 : vector<8x8xf32>
    %c0_28 = arith.constant 0 : index
    %c0_29 = arith.constant 0 : index
    %41 = vector.load %arg9[%c0_28, %c0_29] : memref<8x8xf32, #tpu.memory_space<vmem>>, vector<8x8xf32>
    %42 = arith.mulf %37, %41 : vector<8x8xf32>
    %43 = arith.addf %28, %42 : vector<8x8xf32>
    %c0_30 = arith.constant 0 : index
    %c0_31 = arith.constant 0 : index
    %44 = vector.load %arg10[%c0_30, %c0_31] : memref<8x2xf32, #tpu.memory_space<vmem>>, vector<8x2xf32>
    %45 = arith.addf %36, %44 : vector<8x2xf32>
    %46 = vector.extract_strided_slice %45 {offsets = [0, 0], sizes = [8, 1], strides = [1, 1]} : vector<8x2xf32> to vector<8x1xf32>
    %47 = vector.extract_strided_slice %45 {offsets = [0, 1], sizes = [8, 1], strides = [1, 1]} : vector<8x2xf32> to vector<8x1xf32>
    %48 = arith.cmpf oge, %46, %47 : vector<8x1xf32>
    %49 = arith.extui %48 : vector<8x1xi1> to vector<8x1xi32>
    %50 = arith.sitofp %49 : vector<8x1xi32> to vector<8x1xf32>
    %51 = vector.extract_strided_slice %43 {offsets = [0, 0], sizes = [8, 4], strides = [1, 1]} : vector<8x8xf32> to vector<8x4xf32>
    %52 = vector.broadcast %50 : vector<8x1xf32> to vector<8x4xf32>
    %53 = arith.mulf %52, %51 : vector<8x4xf32>
    %cst_32 = arith.constant 1.000000e+00 : f32
    %54 = vector.broadcast %cst_32 : f32 to vector<8x1xf32>
    %55 = arith.subf %54, %50 : vector<8x1xf32>
    %56 = vector.extract_strided_slice %43 {offsets = [0, 4], sizes = [8, 4], strides = [1, 1]} : vector<8x8xf32> to vector<8x4xf32>
    %57 = vector.broadcast %55 : vector<8x1xf32> to vector<8x4xf32>
    %58 = arith.mulf %57, %56 : vector<8x4xf32>
    %59 = arith.addf %53, %58 : vector<8x4xf32>
    %60 = math.tanh %59 : vector<8x4xf32>
    %cst_33 = arith.constant dense<0xFF800000> : vector<8xf32>
    %61 = vector.multi_reduction <maximumf>, %36, %cst_33 [1] : vector<8x2xf32> to vector<8xf32>
    %62 = vector.shape_cast %61 : vector<8xf32> to vector<8x1xf32>
    %63 = vector.broadcast %62 : vector<8x1xf32> to vector<8x2xf32>
    %64 = arith.subf %36, %63 : vector<8x2xf32>
    %65 = math.exp %64 : vector<8x2xf32>
    %cst_34 = arith.constant dense<0.000000e+00> : vector<8xf32>
    %66 = vector.multi_reduction <add>, %65, %cst_34 [1] : vector<8x2xf32> to vector<8xf32>
    %67 = vector.shape_cast %66 : vector<8xf32> to vector<8x1xf32>
    %68 = math.log %67 : vector<8x1xf32>
    %69 = arith.addf %62, %68 : vector<8x1xf32>
    %70 = vector.broadcast %69 : vector<8x1xf32> to vector<8x2xf32>
    %71 = arith.subf %36, %70 : vector<8x2xf32>
    %72 = vector.extract_strided_slice %28 {offsets = [0, 0], sizes = [8, 4], strides = [1, 1]} : vector<8x8xf32> to vector<8x4xf32>
    %73 = vector.extract_strided_slice %33 {offsets = [0, 0], sizes = [8, 4], strides = [1, 1]} : vector<8x8xf32> to vector<8x4xf32>
    %74 = vector.extract_strided_slice %40 {offsets = [0, 0], sizes = [8, 4], strides = [1, 1]} : vector<8x8xf32> to vector<8x4xf32>
    %75 = arith.subf %59, %72 : vector<8x4xf32>
    %76 = arith.mulf %75, %74 : vector<8x4xf32>
    %cst_35 = arith.constant -5.000000e-01 : f32
    %77 = vector.broadcast %cst_35 : f32 to vector<8x4xf32>
    %78 = arith.mulf %77, %76 : vector<8x4xf32>
    %79 = arith.mulf %78, %76 : vector<8x4xf32>
    %80 = arith.subf %79, %73 : vector<8x4xf32>
    %cst_36 = arith.constant 0.918938517 : f32
    %81 = vector.broadcast %cst_36 : f32 to vector<8x4xf32>
    %82 = arith.subf %80, %81 : vector<8x4xf32>
    %83 = vector.extract_strided_slice %71 {offsets = [0, 0], sizes = [8, 1], strides = [1, 1]} : vector<8x2xf32> to vector<8x1xf32>
    %84 = vector.broadcast %83 : vector<8x1xf32> to vector<8x4xf32>
    %85 = arith.addf %84, %82 : vector<8x4xf32>
    %86 = vector.extract_strided_slice %28 {offsets = [0, 4], sizes = [8, 4], strides = [1, 1]} : vector<8x8xf32> to vector<8x4xf32>
    %87 = vector.extract_strided_slice %33 {offsets = [0, 4], sizes = [8, 4], strides = [1, 1]} : vector<8x8xf32> to vector<8x4xf32>
    %88 = vector.extract_strided_slice %40 {offsets = [0, 4], sizes = [8, 4], strides = [1, 1]} : vector<8x8xf32> to vector<8x4xf32>
    %89 = arith.subf %59, %86 : vector<8x4xf32>
    %90 = arith.mulf %89, %88 : vector<8x4xf32>
    %cst_37 = arith.constant -5.000000e-01 : f32
    %91 = vector.broadcast %cst_37 : f32 to vector<8x4xf32>
    %92 = arith.mulf %91, %90 : vector<8x4xf32>
    %93 = arith.mulf %92, %90 : vector<8x4xf32>
    %94 = arith.subf %93, %87 : vector<8x4xf32>
    %cst_38 = arith.constant 0.918938517 : f32
    %95 = vector.broadcast %cst_38 : f32 to vector<8x4xf32>
    %96 = arith.subf %94, %95 : vector<8x4xf32>
    %97 = vector.extract_strided_slice %71 {offsets = [0, 1], sizes = [8, 1], strides = [1, 1]} : vector<8x2xf32> to vector<8x1xf32>
    %98 = vector.broadcast %97 : vector<8x1xf32> to vector<8x4xf32>
    %99 = arith.addf %98, %96 : vector<8x4xf32>
    %100 = arith.maximumf %85, %99 : vector<8x4xf32>
    %cst_39 = arith.constant 0.000000e+00 : f32
    %101 = vector.broadcast %cst_39 : f32 to vector<8x4xf32>
    %102 = arith.subf %85, %100 : vector<8x4xf32>
    %103 = math.exp %102 : vector<8x4xf32>
    %104 = arith.addf %101, %103 : vector<8x4xf32>
    %105 = arith.subf %99, %100 : vector<8x4xf32>
    %106 = math.exp %105 : vector<8x4xf32>
    %107 = arith.addf %104, %106 : vector<8x4xf32>
    %108 = math.log %107 : vector<8x4xf32>
    %109 = arith.addf %100, %108 : vector<8x4xf32>
    %110 = arith.mulf %60, %60 : vector<8x4xf32>
    %cst_40 = arith.constant 1.000000e+00 : f32
    %111 = vector.broadcast %cst_40 : f32 to vector<8x4xf32>
    %112 = arith.subf %111, %110 : vector<8x4xf32>
    %cst_41 = arith.constant 9.99999997E-7 : f32
    %113 = vector.broadcast %cst_41 : f32 to vector<8x4xf32>
    %114 = arith.addf %112, %113 : vector<8x4xf32>
    %115 = math.log %114 : vector<8x4xf32>
    %116 = arith.subf %109, %115 : vector<8x4xf32>
    %cst_42 = arith.constant dense<0.000000e+00> : vector<8xf32>
    %117 = vector.multi_reduction <add>, %116, %cst_42 [1] : vector<8x4xf32> to vector<8xf32>
    %118 = vector.shape_cast %117 : vector<8xf32> to vector<8x1xf32>
    %cst_43 = arith.constant 0.000000e+00 : f32
    %119 = vector.broadcast %cst_43 : f32 to vector<8x89xf32>
    %120 = tpu.concatenate %60, %59, %118, %109, %28, %33, %37, %36, %119 in 1 : vector<8x4xf32>, vector<8x4xf32>, vector<8x1xf32>, vector<8x4xf32>, vector<8x8xf32>, vector<8x8xf32>, vector<8x8xf32>, vector<8x2xf32>, vector<8x89xf32> -> vector<8x128xf32>
    %c0_44 = arith.constant 0 : index
    %c0_45 = arith.constant 0 : index
    %121 = vector.load %arg11[%c0_44, %c0_45] : memref<8x128xf32, #tpu.memory_space<vmem>>, vector<8x128xf32>
    tpu.vector_store %arg11[%c0_44, %c0_45], %120 {strides = array<i32>} : memref<8x128xf32, #tpu.memory_space<vmem>>, vector<8x128xf32>,
    return
  }
}

</mosaic_0001>

<llo_original>
// kernel: tpu_custom_call.1
$region0: #{tpu_custom_call.1}
  #allocation0 [shape = 'u32[]', space=smem, size = 0x4, offset = 0x4, fixed_abs, tag = 'smem constant byte address 0x4 - core index']
  #allocation1 [shape = 'u32[144,128]{1,0:T(1,128)}', space=vmem, size = 0x12000, scoped, tag = 'internal scratch']
  %s0 = inlined_call_operand.vmem [shape: f32[8,10], index: 0, kind: input, shape index: {}]
  %s1 = inlined_call_operand.vmem [shape: f32[8,6], index: 1, kind: input, shape index: {}]
  %s2 = inlined_call_operand.vmem [shape: f32[10,32], index: 2, kind: input, shape index: {}]
  %s3 = inlined_call_operand.hbm [shape: f32[6,32], index: 3, kind: input, shape index: {}]
  %s4 = inlined_call_operand.hbm [shape: f32[1,32], index: 4, kind: input, shape index: {}]
  %s5 = inlined_call_operand.vmem [shape: f32[32,32], index: 5, kind: input, shape index: {}]
  %s6 = inlined_call_operand.hbm [shape: f32[1,32], index: 6, kind: input, shape index: {}]
  %s7 = inlined_call_operand.vmem [shape: f32[32,18], index: 7, kind: input, shape index: {}]
  %s8 = inlined_call_operand.hbm [shape: f32[1,18], index: 8, kind: input, shape index: {}]
  %s9 = inlined_call_operand.vmem [shape: f32[8,8], index: 9, kind: input, shape index: {}]
  %s10 = inlined_call_operand.vmem [shape: f32[8,2], index: 10, kind: input, shape index: {}]
  %s11 = inlined_call_operand.hbm [shape: f32[8,128], index: 11, kind: output, shape index: {}]
  %s12 = sld [smem:[#allocation0]]
  $region70: #{tpu_custom_call.1} parent=0
    _
  %s14 = ssub.s32 1, %s12
  %s15 = scalar_select 0, %s14, %s12
  $region1: #{tpu_custom_call.1} parent=0
    #allocation2 [shape = 'u8[4096]{0}', space=vmem, size = 0x1000, scoped, tag = 'input window, operand 3, single buffered']
    #allocation3 [shape = 's32[1]{0}', space=sflag, size = 0x4, scoped, tag = 'scoped memory for tpu_custom_call.1']
    #allocation4 [shape = 's32[1]{0}', space=sflag, size = 0x4, scoped, tag = 'scoped memory for tpu_custom_call.1']
    #allocation5 [shape = 'u8[512]{0}', space=vmem, size = 0x400, scoped, tag = 'input window, operand 4, single buffered']
    #allocation6 [shape = 's32[1]{0}', space=sflag, size = 0x4, scoped, tag = 'scoped memory for tpu_custom_call.1']
    #allocation7 [shape = 'u8[512]{0}', space=vmem, size = 0x400, scoped, tag = 'input window, operand 6, single buffered']
    #allocation8 [shape = 'u8[512]{0}', space=vmem, size = 0x400, scoped, tag = 'input window, operand 8, single buffered']
    #allocation9 [shape = 's32[1]{0}', space=sflag, size = 0x4, scoped, tag = 'scoped memory for tpu_custom_call.1']
    #allocation10 [shape = 'u8[4096]{0}', space=vmem, size = 0x1000, scoped, tag = 'output window, operand 0, single buffered']
    %16 = vsyncpa [#allocation3], 0
    %17 = vsyncpa [#allocation6], 0
    %18 = vsyncpa [#allocation9], 0
    %19 = vsyncpa [#allocation4], 0
    // Predicated region
    $region2: #{tpu_custom_call.1} parent=1 // pred_check
      _
    $region3: #{tpu_custom_call.1} parent=1 // pred_check_branch
      %21 = sbr.rel (0) target = $region5
    $region4: #{tpu_custom_call.1} parent=1 // pred_region
      _
    $region5: #{tpu_custom_call.1} parent=1 // pred_fallthru
      _
    // Predicated region
    $region6: #{tpu_custom_call.1} parent=1 // pred_check
      _
    $region7: #{tpu_custom_call.1} parent=1 // pred_check_branch
      %23 = sbr.rel (0) target = $region9
    $region8: #{tpu_custom_call.1} parent=1 // pred_region
      _
    $region9: #{tpu_custom_call.1} parent=1 // pred_fallthru
      _
    // Predicated region
    $region10: #{tpu_custom_call.1} parent=1 // pred_check
      _
    $region11: #{tpu_custom_call.1} parent=1 // pred_check_branch
      %25 = sbr.rel (0) target = $region13
    $region12: #{tpu_custom_call.1} parent=1 // pred_region
      _
    $region13: #{tpu_custom_call.1} parent=1 // pred_fallthru
      _
    // Predicated region
    $region14: #{tpu_custom_call.1} parent=1 // pred_check
      _
    $region15: #{tpu_custom_call.1} parent=1 // pred_check_branch
      %27 = sbr.rel (0) target = $region17
    $region16: #{tpu_custom_call.1} parent=1 // pred_region
      %s29 = ssub.s32 128, 128
      %30 = vsyncadd [#allocation3], %s29
      %s32 = sshll.u32 [#allocation2], 4
      %s33 = int_to_ptr.vmem [resolvable:$true] %s32
      %35 = dma.hbm_to_vmem [thread:$0]  %s3, 128, %s33, [#allocation3]
    $region17: #{tpu_custom_call.1} parent=1 // pred_fallthru
      _
    // Predicated region
    $region18: #{tpu_custom_call.1} parent=1 // pred_check
      _
    $region19: #{tpu_custom_call.1} parent=1 // pred_check_branch
      %37 = sbr.rel (0) target = $region21
    $region20: #{tpu_custom_call.1} parent=1 // pred_region
      %s39 = ssub.s32 16, 16
      %40 = vsyncadd [#allocation6], %s39
      %s42 = sshll.u32 [#allocation5], 4
      %s43 = int_to_ptr.vmem [resolvable:$true] %s42
      %45 = dma.hbm_to_vmem [thread:$0]  %s4, 16, %s43, [#allocation6]
    $region21: #{tpu_custom_call.1} parent=1 // pred_fallthru
      _
    // Predicated region
    $region22: #{tpu_custom_call.1} parent=1 // pred_check
      _
    $region23: #{tpu_custom_call.1} parent=1 // pred_check_branch
      %47 = sbr.rel (0) target = $region25
    $region24: #{tpu_custom_call.1} parent=1 // pred_region
      _
    $region25: #{tpu_custom_call.1} parent=1 // pred_fallthru
      _
    // Predicated region
    $region26: #{tpu_custom_call.1} parent=1 // pred_check
      _
    $region27: #{tpu_custom_call.1} parent=1 // pred_check_branch
      %49 = sbr.rel (0) target = $region29
    $region28: #{tpu_custom_call.1} parent=1 // pred_region
      %s51 = ssub.s32 16, 16
      %52 = vsyncadd [#allocation6], %s51
      %s54 = sshll.u32 [#allocation7], 4
      %s55 = int_to_ptr.vmem [resolvable:$true] %s54
      %57 = dma.hbm_to_vmem [thread:$0]  %s6, 16, %s55, [#allocation6]
    $region29: #{tpu_custom_call.1} parent=1 // pred_fallthru
      _
    // Predicated region
    $region30: #{tpu_custom_call.1} parent=1 // pred_check
      _
    $region31: #{tpu_custom_call.1} parent=1 // pred_check_branch
      %59 = sbr.rel (0) target = $region33
    $region32: #{tpu_custom_call.1} parent=1 // pred_region
      _
    $region33: #{tpu_custom_call.1} parent=1 // pred_fallthru
      _
    // Predicated region
    $region34: #{tpu_custom_call.1} parent=1 // pred_check
      _
    $region35: #{tpu_custom_call.1} parent=1 // pred_check_branch
      %61 = sbr.rel (0) target = $region37
    $region36: #{tpu_custom_call.1} parent=1 // pred_region
      %s63 = ssub.s32 16, 16
      %64 = vsyncadd [#allocation9], %s63
      %s66 = sshll.u32 [#allocation8], 4
      %s67 = int_to_ptr.vmem [resolvable:$true] %s66
      %69 = dma.hbm_to_vmem [thread:$0]  %s8, 16, %s67, [#allocation9]
    $region37: #{tpu_custom_call.1} parent=1 // pred_fallthru
      _
    // Predicated region
    $region38: #{tpu_custom_call.1} parent=1 // pred_check
      _
    $region39: #{tpu_custom_call.1} parent=1 // pred_check_branch
      %71 = sbr.rel (0) target = $region41
    $region40: #{tpu_custom_call.1} parent=1 // pred_region
      _
    $region41: #{tpu_custom_call.1} parent=1 // pred_fallthru
      _
    // Predicated region
    $region42: #{tpu_custom_call.1} parent=1 // pred_check
      _
    $region43: #{tpu_custom_call.1} parent=1 // pred_check_branch
      %73 = sbr.rel (0) target = $region45
    $region44: #{tpu_custom_call.1} parent=1 // pred_region
      _
    $region45: #{tpu_custom_call.1} parent=1 // pred_fallthru
      _
    // Predicated region
    $region46: #{tpu_custom_call.1} parent=1 // pred_check
      _
    $region47: #{tpu_custom_call.1} parent=1 // pred_check_branch
      %75 = sbr.rel (0) target = $region49
    $region48: #{tpu_custom_call.1} parent=1 // pred_region
      %76 = dma.done [#allocation3], 128
    $region49: #{tpu_custom_call.1} parent=1 // pred_fallthru
      _
    // Predicated region
    $region50: #{tpu_custom_call.1} parent=1 // pred_check
      _
    $region51: #{tpu_custom_call.1} parent=1 // pred_check_branch
      %78 = sbr.rel (0) target = $region53
    $region52: #{tpu_custom_call.1} parent=1 // pred_region
      %79 = dma.done [#allocation6], 16
    $region53: #{tpu_custom_call.1} parent=1 // pred_fallthru
      _
    // Predicated region
    $region54: #{tpu_custom_call.1} parent=1 // pred_check
      _
    $region55: #{tpu_custom_call.1} parent=1 // pred_check_branch
      %81 = sbr.rel (0) target = $region57
    $region56: #{tpu_custom_call.1} parent=1 // pred_region
      %82 = dma.done [#allocation6], 16
    $region57: #{tpu_custom_call.1} parent=1 // pred_fallthru
      _
    // Predicated region
    $region58: #{tpu_custom_call.1} parent=1 // pred_check
      _
    $region59: #{tpu_custom_call.1} parent=1 // pred_check_branch
      %84 = sbr.rel (0) target = $region61
    $region60: #{tpu_custom_call.1} parent=1 // pred_region
      %85 = dma.done [#allocation9], 16
    $region61: #{tpu_custom_call.1} parent=1 // pred_fallthru
      _
    %v86 = vld [vmem:[%s0] sm:$0xff]
    %v87 = vld [vmem:[%s2] sm:$0xff]
    %v88 = vld [vmem:[%s2 + $0x8] sm:$0x3]
    %v89 = vld [vmem:[%s1] sm:$0xff]
    %v90 = vld [vmem:[#allocation2] sm:$0x3f]
    %vm91 = vcmask 48128
    %v93 = vsel %vm91, %v89, 0
    %vm95 = vcmask 1045504
    %v97 = vsel %vm95, %v90, 0
    %99 = vmatprep.subr.mxu0 0.0
    %100 = vmatpush1.msra.mxu0 %v97
    %101 = vmatprep.subr.mxu0 0.0
    %102 = vmatpush1.msra.mxu0 0.0
    %103 = vmatprep.subr.mxu0 0.0
    %104 = vmatpush1.msra.mxu0 0.0
    %105 = vmatprep.subr.mxu0 0.0
    %106 = vmatpush1.msra.mxu0 0.0
    %107 = vmatprep.subr.mxu0 0.0
    %108 = vmatpush1.msra.mxu0 0.0
    %109 = vmatprep.subr.mxu0 0.0
    %110 = vmatpush1.msra.mxu0 0.0
    %111 = vmatprep.subr.mxu0 0.0
    %112 = vmatpush1.msra.mxu0 0.0
    %113 = vmatprep.subr.mxu0 0.0
    %114 = vmatpush1.msra.mxu0 0.0
    %115 = vmatprep.subr.mxu0 0.0
    %116 = vmatpush1.msra.mxu0 0.0
    %117 = vmatprep.subr.mxu0 0.0
    %118 = vmatpush1.msra.mxu0 0.0
    %119 = vmatprep.subr.mxu0 0.0
    %120 = vmatpush1.msra.mxu0 0.0
    %121 = vmatprep.subr.mxu0 0.0
    %122 = vmatpush1.msra.mxu0 0.0
    %123 = vmatprep.subr.mxu0 0.0
    %124 = vmatpush1.msra.mxu0 0.0
    %125 = vmatprep.subr.mxu0 0.0
    %126 = vmatpush1.msra.mxu0 0.0
    %127 = vmatprep.subr.mxu0 0.0
    %128 = vmatpush1.msra.mxu0 0.0
    %129 = vmatprep.subr.mxu0 0.0
    %130 = vmatpush1.msra.mxu0 0.0
    %131 = vmatprep.subr.mxu0 0.0
    %132 = vmatpush1.msra.mxu0 0.0
    %133 = vmatprep.subr.mxu0 0.0
    %134 = vmatpush1.msra.mxu0 0.0
    %135 = vmatprep.subr.mxu0 0.0
    %136 = vmatpush1.msra.mxu0 0.0
    %137 = vmatprep.subr.mxu0 0.0
    %138 = vmatpush1.msra.mxu0 0.0
    %139 = vmatprep.subr.mxu0 0.0
    %140 = vmatpush1.msra.mxu0 0.0
    %141 = vmatprep.subr.mxu0 0.0
    %142 = vmatpush1.msra.mxu0 0.0
    %143 = vmatprep.subr.mxu0 0.0
    %144 = vmatpush1.msra.mxu0 0.0
    %145 = vmatprep.subr.mxu0 0.0
    %146 = vmatpush1.msra.mxu0 0.0
    %147 = vmatprep.subr.mxu0 0.0
    %148 = vmatpush1.msra.mxu0 0.0
    %149 = vmatprep.subr.mxu0 0.0
    %150 = vmatpush1.msra.mxu0 0.0
    %151 = vmatprep.subr.mxu0 0.0
    %152 = vmatpush1.msra.mxu0 0.0
    %153 = vmatprep.subr.mxu0 0.0
    %154 = vmatpush1.msra.mxu0 0.0
    %155 = vmatprep.subr.mxu0 0.0
    %156 = vmatpush1.msra.mxu0 0.0
    %157 = vmatprep.subr.mxu0 0.0
    %158 = vmatpush1.msra.mxu0 0.0
    %159 = vmatprep.subr.mxu0 0.0
    %160 = vmatpush1.msra.mxu0 0.0
    %161 = vmatprep.subr.mxu0 0.0
    %162 = vmatpush1.msra.mxu0 0.0
    %163 = vmatprep.mubr.f32.mxu0 0.0
    %164 = vmatmul.mubr.f32.gmra.mrb[0].mxu0 %v93
    %v165 = vpop.f32.mrb[0].mxu0
    %v166 = vadd.f32 0.0, %v165
    %v167 = vpop.f32.mrb[0].mxu0
    %168 = vdwg.mxu0
    %vm169 = vcmask 80896
    %v171 = vsel %vm169, %v86, 0
    %vm173 = vcmask 1041408
    %v175 = vsel %vm173, %v88, 0
    %177 = vmatprep.subr.mxu0 0.0
    %178 = vmatpush1.msra.mxu0 %v87
    %179 = vmatprep.subr.mxu0 0.0
    %180 = vmatpush1.msra.mxu0 %v175
    %181 = vmatprep.subr.mxu0 0.0
    %182 = vmatpush1.msra.mxu0 0.0
    %183 = vmatprep.subr.mxu0 0.0
    %184 = vmatpush1.msra.mxu0 0.0
    %185 = vmatprep.subr.mxu0 0.0
    %186 = vmatpush1.msra.mxu0 0.0
    %187 = vmatprep.subr.mxu0 0.0
    %188 = vmatpush1.msra.mxu0 0.0
    %189 = vmatprep.subr.mxu0 0.0
    %190 = vmatpush1.msra.mxu0 0.0
    %191 = vmatprep.subr.mxu0 0.0
    %192 = vmatpush1.msra.mxu0 0.0
    %193 = vmatprep.subr.mxu0 0.0
    %194 = vmatpush1.msra.mxu0 0.0
    %195 = vmatprep.subr.mxu0 0.0
    %196 = vmatpush1.msra.mxu0 0.0
    %197 = vmatprep.subr.mxu0 0.0
    %198 = vmatpush1.msra.mxu0 0.0
    %199 = vmatprep.subr.mxu0 0.0
    %200 = vmatpush1.msra.mxu0 0.0
    %201 = vmatprep.subr.mxu0 0.0
    %202 = vmatpush1.msra.mxu0 0.0
    %203 = vmatprep.subr.mxu0 0.0
    %204 = vmatpush1.msra.mxu0 0.0
    %205 = vmatprep.subr.mxu0 0.0
    %206 = vmatpush1.msra.mxu0 0.0
    %207 = vmatprep.subr.mxu0 0.0
    %208 = vmatpush1.msra.mxu0 0.0
    %209 = vmatprep.subr.mxu0 0.0
    %210 = vmatpush1.msra.mxu0 0.0
    %211 = vmatprep.subr.mxu0 0.0
    %212 = vmatpush1.msra.mxu0 0.0
    %213 = vmatprep.subr.mxu0 0.0
    %214 = vmatpush1.msra.mxu0 0.0
    %215 = vmatprep.subr.mxu0 0.0
    %216 = vmatpush1.msra.mxu0 0.0
    %217 = vmatprep.subr.mxu0 0.0
    %218 = vmatpush1.msra.mxu0 0.0
    %219 = vmatprep.subr.mxu0 0.0
    %220 = vmatpush1.msra.mxu0 0.0
    %221 = vmatprep.subr.mxu0 0.0
    %222 = vmatpush1.msra.mxu0 0.0
    %223 = vmatprep.subr.mxu0 0.0
    %224 = vmatpush1.msra.mxu0 0.0
    %225 = vmatprep.subr.mxu0 0.0
    %226 = vmatpush1.msra.mxu0 0.0
    %227 = vmatprep.subr.mxu0 0.0
    %228 = vmatpush1.msra.mxu0 0.0
    %229 = vmatprep.subr.mxu0 0.0
    %230 = vmatpush1.msra.mxu0 0.0
    %231 = vmatprep.subr.mxu0 0.0
    %232 = vmatpush1.msra.mxu0 0.0
    %233 = vmatprep.subr.mxu0 0.0
    %234 = vmatpush1.msra.mxu0 0.0
    %235 = vmatprep.subr.mxu0 0.0
    %236 = vmatpush1.msra.mxu0 0.0
    %237 = vmatprep.subr.mxu0 0.0
    %238 = vmatpush1.msra.mxu0 0.0
    %239 = vmatprep.subr.mxu0 0.0
    %240 = vmatpush1.msra.mxu0 0.0
    %241 = vmatprep.mubr.f32.mxu0 0.0
    %242 = vmatmul.mubr.f32.gmra.mrb[0].mxu0 %v171
    %v243 = vpop.f32.mrb[0].mxu0
    %v244 = vadd.f32 %v166, %v243
    %v245 = vpop.f32.mrb[0].mxu0
    %246 = vdwg.mxu0
    %v247 = vld [vmem:[#allocation5] sm:$0x1]
    %v249 = vlaneseq
    %v250 = vshrl.u32 %v249, 7
    %v251 = vsub.s32 0, %v250
    %v252 = vrot.slane %v247, %v251
    %v254 = vadd.f32 %v244, %v252
    %v255 = vmax.f32 %v254, 0.0
    %v256 = vld [vmem:[%s5] sm:$0xff]
    %v257 = vld [vmem:[%s5 + $0x8] sm:$0xff]
    %v258 = vld [vmem:[%s5 + $0x10] sm:$0xff]
    %v259 = vld [vmem:[%s5 + $0x18] sm:$0xff]
    %v260 = vld [vmem:[#allocation7] sm:$0x1]
    %v262 = vlaneseq
    %v263 = vshrl.u32 %v262, 7
    %v264 = vsub.s32 0, %v263
    %v265 = vrot.slane %v260, %v264
    %vm267 = vcmask 261120
    %v269 = vsel %vm267, %v255, 0
    %271 = vmatprep.subr.mxu0 0.0
    %272 = vmatpush1.msra.mxu0 %v256
    %273 = vmatprep.subr.mxu0 0.0
    %274 = vmatpush1.msra.mxu0 %v257
    %275 = vmatprep.subr.mxu0 0.0
    %276 = vmatpush1.msra.mxu0 %v258
    %277 = vmatprep.subr.mxu0 0.0
    %278 = vmatpush1.msra.mxu0 %v259
    %279 = vmatprep.subr.mxu0 0.0
    %280 = vmatpush1.msra.mxu0 0.0
    %281 = vmatprep.subr.mxu0 0.0
    %282 = vmatpush1.msra.mxu0 0.0
    %283 = vmatprep.subr.mxu0 0.0
    %284 = vmatpush1.msra.mxu0 0.0
    %285 = vmatprep.subr.mxu0 0.0
    %286 = vmatpush1.msra.mxu0 0.0
    %287 = vmatprep.subr.mxu0 0.0
    %288 = vmatpush1.msra.mxu0 0.0
    %289 = vmatprep.subr.mxu0 0.0
    %290 = vmatpush1.msra.mxu0 0.0
    %291 = vmatprep.subr.mxu0 0.0
    %292 = vmatpush1.msra.mxu0 0.0
    %293 = vmatprep.subr.mxu0 0.0
    %294 = vmatpush1.msra.mxu0 0.0
    %295 = vmatprep.subr.mxu0 0.0
    %296 = vmatpush1.msra.mxu0 0.0
    %297 = vmatprep.subr.mxu0 0.0
    %298 = vmatpush1.msra.mxu0 0.0
    %299 = vmatprep.subr.mxu0 0.0
    %300 = vmatpush1.msra.mxu0 0.0
    %301 = vmatprep.subr.mxu0 0.0
    %302 = vmatpush1.msra.mxu0 0.0
    %303 = vmatprep.subr.mxu0 0.0
    %304 = vmatpush1.msra.mxu0 0.0
    %305 = vmatprep.subr.mxu0 0.0
    %306 = vmatpush1.msra.mxu0 0.0
    %307 = vmatprep.subr.mxu0 0.0
    %308 = vmatpush1.msra.mxu0 0.0
    %309 = vmatprep.subr.mxu0 0.0
    %310 = vmatpush1.msra.mxu0 0.0
    %311 = vmatprep.subr.mxu0 0.0
    %312 = vmatpush1.msra.mxu0 0.0
    %313 = vmatprep.subr.mxu0 0.0
    %314 = vmatpush1.msra.mxu0 0.0
    %315 = vmatprep.subr.mxu0 0.0
    %316 = vmatpush1.msra.mxu0 0.0
    %317 = vmatprep.subr.mxu0 0.0
    %318 = vmatpush1.msra.mxu0 0.0
    %319 = vmatprep.subr.mxu0 0.0
    %320 = vmatpush1.msra.mxu0 0.0
    %321 = vmatprep.subr.mxu0 0.0
    %322 = vmatpush1.msra.mxu0 0.0
    %323 = vmatprep.subr.mxu0 0.0
    %324 = vmatpush1.msra.mxu0 0.0
    %325 = vmatprep.subr.mxu0 0.0
    %326 = vmatpush1.msra.mxu0 0.0
    %327 = vmatprep.subr.mxu0 0.0
    %328 = vmatpush1.msra.mxu0 0.0
    %329 = vmatprep.subr.mxu0 0.0
    %330 = vmatpush1.msra.mxu0 0.0
    %331 = vmatprep.subr.mxu0 0.0
    %332 = vmatpush1.msra.mxu0 0.0
    %333 = vmatprep.subr.mxu0 0.0
    %334 = vmatpush1.msra.mxu0 0.0
    %335 = vmatprep.mubr.f32.mxu0 0.0
    %336 = vmatmul.mubr.f32.gmra.mrb[0].mxu0 %v269
    %v337 = vpop.f32.mrb[0].mxu0
    %v338 = vadd.f32 %v265, %v337
    %v339 = vpop.f32.mrb[0].mxu0
    %340 = vdwg.mxu0
    %v341 = vmax.f32 %v338, 0.0
    %v342 = vld [vmem:[%s7] sm:$0xff]
    %v343 = vld [vmem:[%s7 + $0x8] sm:$0xff]
    %v344 = vld [vmem:[%s7 + $0x10] sm:$0xff]
    %v345 = vld [vmem:[%s7 + $0x18] sm:$0xff]
    %v346 = vld [vmem:[#allocation8] sm:$0x1]
    %v348 = vlaneseq
    %v349 = vshrl.u32 %v348, 7
    %v350 = vsub.s32 0, %v349
    %v351 = vrot.slane %v346, %v350
    %v354 = vsel %vm267, %v341, 0
    %356 = vmatprep.subr.mxu0 0.0
    %357 = vmatpush1.msra.mxu0 %v342
    %358 = vmatprep.subr.mxu0 0.0
    %359 = vmatpush1.msra.mxu0 %v343
    %360 = vmatprep.subr.mxu0 0.0
    %361 = vmatpush1.msra.mxu0 %v344
    %362 = vmatprep.subr.mxu0 0.0
    %363 = vmatpush1.msra.mxu0 %v345
    %364 = vmatprep.subr.mxu0 0.0
    %365 = vmatpush1.msra.mxu0 0.0
    %366 = vmatprep.subr.mxu0 0.0
    %367 = vmatpush1.msra.mxu0 0.0
    %368 = vmatprep.subr.mxu0 0.0
    %369 = vmatpush1.msra.mxu0 0.0
    %370 = vmatprep.subr.mxu0 0.0
    %371 = vmatpush1.msra.mxu0 0.0
    %372 = vmatprep.subr.mxu0 0.0
    %373 = vmatpush1.msra.mxu0 0.0
    %374 = vmatprep.subr.mxu0 0.0
    %375 = vmatpush1.msra.mxu0 0.0
    %376 = vmatprep.subr.mxu0 0.0
    %377 = vmatpush1.msra.mxu0 0.0
    %378 = vmatprep.subr.mxu0 0.0
    %379 = vmatpush1.msra.mxu0 0.0
    %380 = vmatprep.subr.mxu0 0.0
    %381 = vmatpush1.msra.mxu0 0.0
    %382 = vmatprep.subr.mxu0 0.0
    %383 = vmatpush1.msra.mxu0 0.0
    %384 = vmatprep.subr.mxu0 0.0
    %385 = vmatpush1.msra.mxu0 0.0
    %386 = vmatprep.subr.mxu0 0.0
    %387 = vmatpush1.msra.mxu0 0.0
    %388 = vmatprep.subr.mxu0 0.0
    %389 = vmatpush1.msra.mxu0 0.0
    %390 = vmatprep.subr.mxu0 0.0
    %391 = vmatpush1.msra.mxu0 0.0
    %392 = vmatprep.subr.mxu0 0.0
    %393 = vmatpush1.msra.mxu0 0.0
    %394 = vmatprep.subr.mxu0 0.0
    %395 = vmatpush1.msra.mxu0 0.0
    %396 = vmatprep.subr.mxu0 0.0
    %397 = vmatpush1.msra.mxu0 0.0
    %398 = vmatprep.subr.mxu0 0.0
    %399 = vmatpush1.msra.mxu0 0.0
    %400 = vmatprep.subr.mxu0 0.0
    %401 = vmatpush1.msra.mxu0 0.0
    %402 = vmatprep.subr.mxu0 0.0
    %403 = vmatpush1.msra.mxu0 0.0
    %404 = vmatprep.subr.mxu0 0.0
    %405 = vmatpush1.msra.mxu0 0.0
    %406 = vmatprep.subr.mxu0 0.0
    %407 = vmatpush1.msra.mxu0 0.0
    %408 = vmatprep.subr.mxu0 0.0
    %409 = vmatpush1.msra.mxu0 0.0
    %410 = vmatprep.subr.mxu0 0.0
    %411 = vmatpush1.msra.mxu0 0.0
    %412 = vmatprep.subr.mxu0 0.0
    %413 = vmatpush1.msra.mxu0 0.0
    %414 = vmatprep.subr.mxu0 0.0
    %415 = vmatpush1.msra.mxu0 0.0
    %416 = vmatprep.subr.mxu0 0.0
    %417 = vmatpush1.msra.mxu0 0.0
    %418 = vmatprep.subr.mxu0 0.0
    %419 = vmatpush1.msra.mxu0 0.0
    %420 = vmatprep.mubr.f32.mxu0 0.0
    %421 = vmatmul.mubr.f32.gmra.mrb[0].mxu0 %v354
    %v422 = vpop.f32.mrb[0].mxu0
    %v423 = vadd.f32 %v351, %v422
    %v424 = vpop.f32.mrb[0].mxu0
    %425 = vdwg.mxu0
    %v426 = vmax.f32 %v423, -9.0
    %v427 = vmin.f32 %v426, 9.0
    %v428 = vmax.f32 %v423, -5.0
    %v429 = vmin.f32 %v428, 2.0
    %v430 = vmul.f32 %v429, 1.442695
    %v431 = vpow.pop %v430
    %v432 = vsub.f32 0.0, %v429
    %v433 = vmul.f32 %v432, 1.442695
    %v434 = vpow.pop %v433
    %v435 = vld [vmem:[%s9] sm:$0xff]
    %437 = vrot.lane.b32.xlu0 %v435, 8
    %v438 = vpop.permute.xlu0 %437
    %v440 = vmul.f32 %v431, %v438
    %442 = vrot.lane.b32.xlu0 %v440, 120
    %v443 = vpop.permute.xlu0 %442
    %v445 = vadd.f32 %v427, %v443
    %v446 = vld [vmem:[%s10] sm:$0xff]
    %448 = vrot.lane.b32.xlu0 %v446, 16
    %v449 = vpop.permute.xlu0 %448
    %v451 = vadd.f32 %v423, %v449
    %453 = vrot.lane.b32.xlu0 %v451, 127
    %v454 = vpop.permute.xlu0 %453
    %vm456 = vcmp.ge.f32.partialorder %v451, %v454
    %v457 = vsel %vm456, 1, 0
    %v458 = vcvt.s32.f32 %v457
    %460 = vset.pattern.permute.xlu0 16
    %461 = vperm.xlu0 %460, %v458
    %v462 = vpop.permute.xlu0 %461
    %v464 = vmul.f32 %v462, %v445
    %v465 = vsub.f32 1.0, %v458
    %467 = vset.pattern.permute.xlu0 16
    %468 = vperm.xlu0 %467, %v465
    %v469 = vpop.permute.xlu0 %468
    %v471 = vmul.f32 %v469, %v445
    %473 = vrot.lane.b32.xlu0 %v471, 124
    %v474 = vpop.permute.xlu0 %473
    %v476 = vadd.f32 %v464, %v474
    %v477 = vtanh.pop %v476
    %vm478 = vcmask 146560
    %v479 = vsel %vm478, %v423, -inf
    %480 = vmax.xlane.f32.xlu0 %v479
    %v481 = vpop.xlane.xlu0 %480
    %v482 = vsub.f32 %v423, %v481
    %v483 = vmul.f32 %v482, 1.442695
    %v484 = vpow.pop %v483
    %486 = vrot.lane.b32.xlu0 %v484, 112
    %v487 = vpop.permute.xlu0 %486
    %vm489 = vcmask 15360
    %v490 = vsel %vm489, %v487, 0.0
    %491 = vadd.xlane.f32.xlu0 %v490
    %v492 = vpop.xlane.xlu0 %491
    %v493 = vlog2.pop %v492
    %v494 = vmul.f32 %v493, 0.6931472
    %v495 = vadd.f32 %v481, %v494
    %v496 = vsub.f32 %v423, %v495
    %v497 = vsub.f32 %v476, %v427
    %499 = vrot.lane.b32.xlu0 %v434, 120
    %v500 = vpop.permute.xlu0 %499
    %v502 = vmul.f32 %v497, %v500
    %v503 = vmul.f32 %v502, -0.5
    %v504 = vmul.f32 %v503, %v502
    %506 = vrot.lane.b32.xlu0 %v429, 120
    %v507 = vpop.permute.xlu0 %506
    %v509 = vsub.f32 %v504, %v507
    %v510 = vsub.f32 %v509, 0.9189385
    %512 = vset.pattern.permute.xlu0 16
    %513 = vperm.xlu0 %512, %v496
    %v514 = vpop.permute.xlu0 %513
    %v516 = vadd.f32 %v514, %v510
    %518 = vrot.lane.b32.xlu0 %v427, 124
    %v519 = vpop.permute.xlu0 %518
    %v521 = vsub.f32 %v476, %v519
    %522 = vrot.lane.b32.xlu0 %v434, 116
    %v523 = vpop.permute.xlu0 %522
    %v525 = vmul.f32 %v521, %v523
    %v526 = vmul.f32 %v525, -0.5
    %v527 = vmul.f32 %v526, %v525
    %528 = vrot.lane.b32.xlu0 %v429, 116
    %v529 = vpop.permute.xlu0 %528
    %v531 = vsub.f32 %v527, %v529
    %v532 = vsub.f32 %v531, 0.9189385
    %533 = vset.pattern.permute.xlu0 17
    %534 = vperm.xlu0 %533, %v496
    %v535 = vpop.permute.xlu0 %534
    %v537 = vadd.f32 %v535, %v532
    %v538 = vmax.f32 %v516, %v537
    %v539 = vsub.f32 %v516, %v538
    %v540 = vmul.f32 %v539, 1.442695
    %v541 = vpow.pop %v540
    %v542 = vadd.f32 %v541, 0.0
    %v543 = vsub.f32 %v537, %v538
    %v544 = vmul.f32 %v543, 1.442695
    %v545 = vpow.pop %v544
    %v546 = vadd.f32 %v542, %v545
    %v547 = vlog2.pop %v546
    %v548 = vmul.f32 %v547, 0.6931472
    %v549 = vadd.f32 %v538, %v548
    %v550 = vmul.f32 %v477, %v477
    %v551 = vsub.f32 1.0, %v550
    %v552 = vadd.f32 %v551, 1e-06
    %v553 = vlog2.pop %v552
    %v554 = vmul.f32 %v553, 0.6931472
    %v555 = vsub.f32 %v549, %v554
    %vm556 = vcmask 31744
    %v557 = vsel %vm556, %v555, 0.0
    %558 = vadd.xlane.f32.xlu0 %v557
    %v559 = vpop.xlane.xlu0 %558
    %561 = vrot.lane.b32.xlu0 %v476, 4
    %v562 = vpop.permute.xlu0 %561
    %565 = vrot.lane.b32.xlu0 %v549, 9
    %v566 = vpop.permute.xlu0 %565
    %568 = vrot.lane.b32.xlu0 %v427, 13
    %v569 = vpop.permute.xlu0 %568
    %571 = vrot.lane.b32.xlu0 %v429, 13
    %v572 = vpop.permute.xlu0 %571
    %575 = vrot.lane.b32.xlu0 %v431, 21
    %v576 = vpop.permute.xlu0 %575
    %579 = vrot.lane.b32.xlu0 %v423, 21
    %v580 = vpop.permute.xlu0 %579
    %v582 = vsel %vm556, %v477, %v562
    %vm583 = vcmask 64512
    %v584 = vsel %vm583, %v582, %v559
    %vm585 = vcmask 72704
    %v586 = vsel %vm585, %v584, %v566
    %vm587 = vcmask 105472
    %v588 = vsel %vm587, %v586, %v569
    %vm589 = vcmask 171008
    %v590 = vsel %vm589, %v588, %v572
    %vm591 = vcmask 236544
    %v592 = vsel %vm591, %v590, %v576
    %vm593 = vcmask 302080
    %v594 = vsel %vm593, %v592, %v580
    %vm595 = vcmask 318464
    %v596 = vsel %vm595, %v594, 0.0
    %597 = vst [vmem:[#allocation10] sm:$0xff] %v596
    // Predicated region
    $region62: #{tpu_custom_call.1} parent=1 // pred_check
      _
    $region63: #{tpu_custom_call.1} parent=1 // pred_check_branch
      %599 = sbr.rel (0) target = $region65
    $region64: #{tpu_custom_call.1} parent=1 // pred_region
      %s601 = ssub.s32 128, 128
      %602 = vsyncadd [#allocation4], %s601
      %s604 = sshll.u32 [#allocation10], 4
      %s605 = int_to_ptr.vmem [resolvable:$true] %s604
      %607 = dma.vmem_to_hbm [thread:$0]  %s605, 128, %s11, [#allocation4]
    $region65: #{tpu_custom_call.1} parent=1 // pred_fallthru
      _
    // Predicated region
    $region66: #{tpu_custom_call.1} parent=1 // pred_check
      _
    $region67: #{tpu_custom_call.1} parent=1 // pred_check_branch
      %609 = sbr.rel (0) target = $region69
    $region68: #{tpu_custom_call.1} parent=1 // pred_region
      %610 = dma.done [#allocation4], 128
    $region69: #{tpu_custom_call.1} parent=1 // pred_fallthru
      _
    %611 = vsyncpa [#allocation3], 1
    %612 = vsyncpa [#allocation6], 1
    %613 = vsyncpa [#allocation9], 1
    %614 = vsyncpa [#allocation4], 1

</llo_original>
